<compile_context>
chip_gen: v7x
topology: tpu7x:2x2x1
jax: 0.10.0
libtpu: 0.0.40
codegen_flags: <defaults>
</compile_context>

<pallas_src>
import jax
import jax.numpy as jnp
from jax.experimental import pallas as pl
from jax.experimental.pallas import tpu as pltpu

DEFAULT_TRUNC_STD = 0.02
LN_EPS = 1e-5  # PyTorch F.layer_norm default


def _round_up(x, m):
    return ((x + m - 1) // m) * m


def _make_kernel(normalization, has_ln_bias, has_bias, eps):
    """Builds a kernel specialized on which optional operands are present."""

    def kernel(*refs):
        x_ref, w_ref, lnw_ref = refs[0], refs[1], refs[2]
        idx = 3
        lnb_ref = None
        if has_ln_bias:
            lnb_ref = refs[idx]
            idx += 1
        b_ref = None
        if has_bias:
            b_ref = refs[idx]
            idx += 1
        o_ref = refs[idx]
        xn_ref = refs[idx + 1]  # (tm, K) scratch, weight dtype

        # Compute the normalization only when the inner (feature-tile) index is 0:
        # the row tile is resident across the whole inner loop, so xn is cached.
        @pl.when(pl.program_id(1) == 0)
        def _compute_norm():
            x = x_ref[...].astype(jnp.float32)
            inv_k = 1.0 / float(x.shape[-1])
            g = lnw_ref[...].astype(jnp.float32)
            if normalization == "LayerNorm":
                # Two-pass statistics (mean, then centered variance) for precision.
                mean = jnp.sum(x, axis=-1, keepdims=True) * inv_k
                xc = x - mean
                var = jnp.sum(xc * xc, axis=-1, keepdims=True) * inv_k
                xn = xc * jax.lax.rsqrt(var + eps) * g
                if has_ln_bias:
                    xn = xn + lnb_ref[...].astype(jnp.float32)
            else:  # RMSNorm
                ms = jnp.sum(x * x, axis=-1, keepdims=True) * inv_k
                xn = x * jax.lax.rsqrt(ms + eps) * g
            xn_ref[...] = xn.astype(xn_ref.dtype)

        # (tm, K) . (tn, K)^T -> (tm, tn) on the MXU; contraction over K,
        # f32 accumulate.  bf16 weights give a bf16 MXU pass on the cached xn.
        y = jax.lax.dot_general(
            xn_ref[...],
            w_ref[...],
            dimension_numbers=(((1,), (1,)), ((), ())),
            preferred_element_type=jnp.float32,
        )
        if has_bias:
            y = y + b_ref[...].astype(jnp.float32)
        o_ref[...] = y.astype(o_ref.dtype)

    return kernel


def _vmem_budget_bytes():
    """Usable scoped-VMEM budget per generation (~75% of capacity, clamped)."""
    cap = 64 * 1024 * 1024
    try:
        info = pltpu.get_tpu_info()
        cap = int(getattr(info, "vmem_capacity_bytes", cap))
    except Exception:
        pass
    # v5e/v6e (128 MiB) -> 96 MiB; v7x (64 MiB per TC) -> 48 MiB.
    return max(32 * 1024 * 1024, min(cap * 3 // 4, 100 * 1024 * 1024))


def layer_norm_linear(
    x,
    weight,
    bias,
    ln_weight,
    ln_bias=None,
    *,
    normalization="LayerNorm",
    tm=None,
    tn=256,
    eps=LN_EPS,
):
    """x: [..., K]; weight: [N, K]; bias: [N] or None; ln_weight: [K]; ln_bias: [K] or None."""
    if normalization not in ("LayerNorm", "RMSNorm"):
        raise ValueError(f"Invalid normalization: {normalization}")

    orig_shape = x.shape
    K = orig_shape[-1]
    N = weight.shape[0]
    M = 1
    for d in orig_shape[:-1]:
        M *= int(d)
    x2 = x.reshape(M, K)

    has_ln_bias = (normalization == "LayerNorm") and (ln_bias is not None)
    has_bias = bias is not None

    x_isz = jnp.dtype(x.dtype).itemsize
    w_isz = jnp.dtype(weight.dtype).itemsize
    out_isz = x_isz
    xn_isz = w_isz  # xn scratch is cached in the weight dtype

    # Sublane packing for the row dimension: 8 for 32-bit, 16 for bf16, 32 for 8-bit.
    sublane = {4: 8, 2: 16, 1: 32}.get(x_isz, 8)

    # ---- output-feature tiling (lane-dense, multiple of 128, divides Np) ----
    Np = _round_up(N, 128)
    tn_e = min(_round_up(tn, 128), Np)
    while Np % tn_e:
        tn_e -= 128

    # ---- row tiling: grow tm under the per-generation VMEM budget ----
    budget = _vmem_budget_bytes()

    def _est(tm_c):
        return (
            2 * tm_c * K * x_isz            # x block (double-buffered)
            + 2 * tn_e * K * w_isz          # weight block (double-buffered)
            + 2 * tm_c * tn_e * out_isz     # output block (double-buffered)
            + 2 * (2 * K * 4 + tn_e * 4)    # ln params + bias blocks
            + tm_c * K * xn_isz             # xn scratch (single-buffered)
            + 2 * tm_c * K * 4              # f32 temporaries in the norm pass
            + tm_c * tn_e * 4               # f32 matmul accumulator
        )

    upper = 1024 if tm is None else int(tm)
    upper = max(sublane, min(upper, _round_up(M, sublane)))
    tm_e = max(sublane, (upper // sublane) * sublane)
    while tm_e > sublane and _est(tm_e) > budget:
        tm_e = max(sublane, ((tm_e // 2) // sublane) * sublane)

    Mp = _round_up(M, tm_e)

    # ---- padding (skipped when already aligned) ----
    if Mp != M:
        x2 = jnp.pad(x2, ((0, Mp - M), (0, 0)))
    # TODO(synk): for production, pad/pre-process the weight once at parameter
    # init instead of per call (this is a full N*K HBM pass when N % 128 != 0).
    w2 = weight if Np == N else jnp.pad(weight, ((0, Np - N), (0, 0)))

    lnw2 = ln_weight.reshape(1, K)

    in_specs = [
        pl.BlockSpec((tm_e, K), lambda i, j: (i, 0)),   # x row tile (resident over j)
        pl.BlockSpec((tn_e, K), lambda i, j: (j, 0)),   # weight tile, [N, K] layout
        pl.BlockSpec((1, K), lambda i, j: (0, 0)),      # layer-norm weight
    ]
    operands = [x2, w2, lnw2]
    if has_ln_bias:
        in_specs.append(pl.BlockSpec((1, K), lambda i, j: (0, 0)))
        operands.append(ln_bias.reshape(1, K))
    if has_bias:
        b2 = bias.reshape(1, N)
        if Np != N:
            b2 = jnp.pad(b2, ((0, 0), (0, Np - N)))
        in_specs.append(pl.BlockSpec((1, tn_e), lambda i, j: (0, j)))
        operands.append(b2)

    kernel = _make_kernel(normalization, has_ln_bias, has_bias, float(eps))

    out = pl.pallas_call(
        kernel,
        out_shape=jax.ShapeDtypeStruct((Mp, Np), x.dtype),
        grid_spec=pltpu.PrefetchScalarGridSpec(
            num_scalar_prefetch=0,
            grid=(Mp // tm_e, Np // tn_e),
            in_specs=in_specs,
            out_specs=pl.BlockSpec((tm_e, tn_e), lambda i, j: (i, j)),
            scratch_shapes=[pltpu.VMEM((tm_e, K), w2.dtype)],  # cached xn
        ),
        compiler_params=pltpu.CompilerParams(
            # Outer row-tile axis shards across TensorCores; the inner
            # feature-tile axis MUST be "arbitrary" because the xn cache is
            # gated on program_id(1) == 0.
            dimension_semantics=("parallel", "arbitrary"),
            vmem_limit_bytes=budget,
        ),
    )(*operands)

    if Mp != M or Np != N:
        out = out[:M, :N]
    return out.reshape(*orig_shape[:-1], N)


def init_params(key, in_features, out_features, std=DEFAULT_TRUNC_STD):
    # Matches nn.init.trunc_normal_(std=std) (truncated at +/- 2 std), bias zeros,
    # layer_norm weight ones, layer_norm bias zeros.
    w = std * jax.random.truncated_normal(
        key, -2.0, 2.0, (out_features, in_features), dtype=jnp.float32
    )
    b = jnp.zeros((out_features,), dtype=jnp.float32)
    ln_w = jnp.ones((in_features,), dtype=jnp.float32)
    ln_b = jnp.zeros((in_features,), dtype=jnp.float32)
    return w, b, ln_w, ln_b


if __name__ == "__main__":
    B, S, K, N = 2, 8, 32, 48
    key = jax.random.PRNGKey(0)
    kx, kw = jax.random.split(key)

    x = jax.random.normal(kx, (B, S, K), dtype=jnp.float32)
    w, b, ln_w, ln_b = init_params(kw, K, N)

    # --- LayerNorm path ---
    y = layer_norm_linear(x, w, b, ln_w, ln_b, normalization="LayerNorm")
    jax.block_until_ready(y)

    mean = jnp.mean(x, axis=-1, keepdims=True)
    var = jnp.mean((x - mean) ** 2, axis=-1, keepdims=True)
    xn = (x - mean) / jnp.sqrt(var + LN_EPS) * ln_w + ln_b
    y_ref = xn @ w.T + b
    assert y.shape == (B, S, N)
    assert jnp.max(jnp.abs(y - y_ref)) < 1e-4

    # --- RMSNorm path (no layer-norm bias, no linear bias) ---
    y_rms = layer_norm_linear(x, w, None, ln_w, None, normalization="RMSNorm")
    jax.block_until_ready(y_rms)

    xr = x * jax.lax.rsqrt(jnp.mean(x * x, axis=-1, keepdims=True) + LN_EPS) * ln_w
    y_rms_ref = xr @ w.T
    assert y_rms.shape == (B, S, N)
    assert jnp.max(jnp.abs(y_rms - y_rms_ref)) < 1e-4

    print("KERNEL_OK")
</pallas_src>

<mosaic_0001>
module attributes {stable_mosaic.version = 11 : i64} {
  func.func @kernel(%arg0: i32, %arg1: i32, %arg2: memref<16x32xf32, #tpu.memory_space<vmem>>, %arg3: memref<128x32xf32, #tpu.memory_space<vmem>>, %arg4: memref<1x32xf32, #tpu.memory_space<vmem>>, %arg5: memref<1x32xf32, #tpu.memory_space<vmem>>, %arg6: memref<1x128xf32, #tpu.memory_space<vmem>>, %arg7: memref<16x128xf32, #tpu.memory_space<vmem>>, %arg8: memref<16x32xf32, #tpu.memory_space<vmem>>) attributes {dimension_semantics = [#tpu.dimension_semantics<parallel>, #tpu.dimension_semantics<arbitrary>], iteration_bounds = array<i64: 1, 1>, scalar_prefetch = 0 : i64, scratch_operands = 1 : i64, tpu.core_type = #tpu.core_type<tc>, window_params = [{transform_indices = @transform_0, window_bounds = array<i64: 16, 32>}, {transform_indices = @transform_1, window_bounds = array<i64: 128, 32>}, {pipeline_mode = #tpu.pipeline_mode<synchronous>, transform_indices = @transform_2, window_bounds = array<i64: 1, 32>}, {pipeline_mode = #tpu.pipeline_mode<synchronous>, transform_indices = @transform_3, window_bounds = array<i64: 1, 32>}, {transform_indices = @transform_4, window_bounds = array<i64: 1, 128>}, {transform_indices = @transform_5, window_bounds = array<i64: 16, 128>}]} {
    %c0_i32 = arith.constant 0 : i32
    %0 = arith.cmpi eq, %arg1, %c0_i32 : i32
    %1 = arith.extui %0 : i1 to i32
    %c0_i32_0 = arith.constant 0 : i32
    %2 = arith.cmpi ne, %1, %c0_i32_0 : i32
    scf.if %2 {
      %c0_8 = arith.constant 0 : index
      %c0_9 = arith.constant 0 : index
      %10 = vector.load %arg2[%c0_8, %c0_9] : memref<16x32xf32, #tpu.memory_space<vmem>>, vector<16x32xf32>
      %c0_10 = arith.constant 0 : index
      %c0_11 = arith.constant 0 : index
      %11 = vector.load %arg4[%c0_10, %c0_11] : memref<1x32xf32, #tpu.memory_space<vmem>>, vector<1x32xf32>
      %cst_12 = arith.constant dense<0.000000e+00> : vector<16xf32>
      %12 = vector.multi_reduction <add>, %10, %cst_12 [1] : vector<16x32xf32> to vector<16xf32>
      %13 = vector.shape_cast %12 : vector<16xf32> to vector<16x1xf32>
      %cst_13 = arith.constant 3.125000e-02 : f32
      %14 = vector.broadcast %cst_13 : f32 to vector<16x1xf32>
      %15 = arith.mulf %13, %14 : vector<16x1xf32>
      %16 = vector.broadcast %15 : vector<16x1xf32> to vector<16x32xf32>
      %17 = arith.subf %10, %16 : vector<16x32xf32>
      %18 = arith.mulf %17, %17 : vector<16x32xf32>
      %cst_14 = arith.constant dense<0.000000e+00> : vector<16xf32>
      %19 = vector.multi_reduction <add>, %18, %cst_14 [1] : vector<16x32xf32> to vector<16xf32>
      %20 = vector.shape_cast %19 : vector<16xf32> to vector<16x1xf32>
      %cst_15 = arith.constant 3.125000e-02 : f32
      %21 = vector.broadcast %cst_15 : f32 to vector<16x1xf32>
      %22 = arith.mulf %20, %21 : vector<16x1xf32>
      %cst_16 = arith.constant 9.99999974E-6 : f32
      %23 = vector.broadcast %cst_16 : f32 to vector<16x1xf32>
      %24 = arith.addf %22, %23 : vector<16x1xf32>
      %25 = math.rsqrt %24 : vector<16x1xf32>
      %26 = vector.broadcast %25 : vector<16x1xf32> to vector<16x32xf32>
      %27 = arith.mulf %17, %26 : vector<16x32xf32>
      %28 = vector.broadcast %11 : vector<1x32xf32> to vector<16x32xf32>
      %29 = arith.mulf %27, %28 : vector<16x32xf32>
      %c0_17 = arith.constant 0 : index
      %c0_18 = arith.constant 0 : index
      %30 = vector.load %arg5[%c0_17, %c0_18] : memref<1x32xf32, #tpu.memory_space<vmem>>, vector<1x32xf32>
      %31 = vector.broadcast %30 : vector<1x32xf32> to vector<16x32xf32>
      %32 = arith.addf %29, %31 : vector<16x32xf32>
      %c0_19 = arith.constant 0 : index
      %c0_20 = arith.constant 0 : index
      %33 = vector.load %arg8[%c0_19, %c0_20] : memref<16x32xf32, #tpu.memory_space<vmem>>, vector<16x32xf32>
      tpu.vector_store %arg8[%c0_19, %c0_20], %32 {strides = array<i32>} : memref<16x32xf32, #tpu.memory_space<vmem>>, vector<16x32xf32>,
    } else {
    }
    %c0 = arith.constant 0 : index
    %c0_1 = arith.constant 0 : index
    %3 = vector.load %arg8[%c0, %c0_1] : memref<16x32xf32, #tpu.memory_space<vmem>>, vector<16x32xf32>
    %c0_2 = arith.constant 0 : index
    %c0_3 = arith.constant 0 : index
    %4 = vector.load %arg3[%c0_2, %c0_3] : memref<128x32xf32, #tpu.memory_space<vmem>>, vector<128x32xf32>
    %cst = arith.constant dense<0.000000e+00> : vector<16x128xf32>
    %5 = tpu.matmul %3, %4, %cst {dimension_numbers = #tpu.dot_dimension_numbers<[1], [1], [0], [0], [0, 0, 1, 0], [], []>} : vector<16x32xf32>, vector<128x32xf32>, vector<16x128xf32> -> vector<16x128xf32>
    %c0_4 = arith.constant 0 : index
    %c0_5 = arith.constant 0 : index
    %6 = vector.load %arg6[%c0_4, %c0_5] : memref<1x128xf32, #tpu.memory_space<vmem>>, vector<1x128xf32>
    %7 = vector.broadcast %6 : vector<1x128xf32> to vector<16x128xf32>
    %8 = arith.addf %5, %7 : vector<16x128xf32>
    %c0_6 = arith.constant 0 : index
    %c0_7 = arith.constant 0 : index
    %9 = vector.load %arg7[%c0_6, %c0_7] : memref<16x128xf32, #tpu.memory_space<vmem>>, vector<16x128xf32>
    tpu.vector_store %arg7[%c0_6, %c0_7], %8 {strides = array<i32>} : memref<16x128xf32, #tpu.memory_space<vmem>>, vector<16x128xf32>,
    return
  }
  func.func @transform_0(%arg0: i32, %arg1: i32) -> (i32, i32) {
    %c0_i32 = arith.constant 0 : i32
    %c0_i32_0 = arith.constant 0 : i32
    return %arg0, %c0_i32 : i32, i32
  }
  func.func @transform_1(%arg0: i32, %arg1: i32) -> (i32, i32) {
    %c0_i32 = arith.constant 0 : i32
    %c0_i32_0 = arith.constant 0 : i32
    return %arg1, %c0_i32 : i32, i32
  }
  func.func @transform_2(%arg0: i32, %arg1: i32) -> (i32, i32) {
    %c0_i32 = arith.constant 0 : i32
    %c0_i32_0 = arith.constant 0 : i32
    %c0_i32_1 = arith.constant 0 : i32
    return %c0_i32, %c0_i32_0 : i32, i32
  }
  func.func @transform_3(%arg0: i32, %arg1: i32) -> (i32, i32) {
    %c0_i32 = arith.constant 0 : i32
    %c0_i32_0 = arith.constant 0 : i32
    %c0_i32_1 = arith.constant 0 : i32
    return %c0_i32, %c0_i32_0 : i32, i32
  }
  func.func @transform_4(%arg0: i32, %arg1: i32) -> (i32, i32) {
    %c0_i32 = arith.constant 0 : i32
    %c0_i32_0 = arith.constant 0 : i32
    return %c0_i32, %arg1 : i32, i32
  }
  func.func @transform_5(%arg0: i32, %arg1: i32) -> (i32, i32) {
    %c0_i32 = arith.constant 0 : i32
    return %arg0, %arg1 : i32, i32
  }
}

</mosaic_0001>

<llo_original>
// kernel: tpu_custom_call.1
$region0: #{tpu_custom_call.1}
  #allocation0 [shape = 'u32[]', space=smem, size = 0x4, offset = 0x4, fixed_abs, tag = 'smem constant byte address 0x4 - core index']
  #allocation1 [shape = 'u32[144,128]{1,0:T(1,128)}', space=vmem, size = 0x12000, scoped, tag = 'internal scratch']
  #allocation2 [shape = 'f32[16,32]{1,0:T(8,128)}', space=vmem, size = 0x2000, scoped, tag = 'scratch operand']
  %s0 = inlined_call_operand.vmem [shape: f32[16,32], index: 0, kind: input, shape index: {}]
  %s1 = inlined_call_operand.vmem [shape: f32[128,32], index: 1, kind: input, shape index: {}]
  %s2 = inlined_call_operand.vmem [shape: f32[1,32], index: 2, kind: input, shape index: {}]
  %s3 = inlined_call_operand.vmem [shape: f32[1,32], index: 3, kind: input, shape index: {}]
  %s4 = inlined_call_operand.vmem [shape: f32[1,128], index: 4, kind: input, shape index: {}]
  %s5 = inlined_call_operand.hbm [shape: f32[16,128], index: 5, kind: output, shape index: {}]
  %s6 = sld [smem:[#allocation0]]
  $region34: #{tpu_custom_call.1} parent=0
    _
  %s8 = ssub.s32 1, %s6
  %s9 = scalar_select 0, %s8, %s6
  $region1: #{tpu_custom_call.1} parent=0
    #allocation3 [shape = 'u8[8192]{0}', space=vmem, size = 0x2000, scoped, tag = 'output window, operand 0, single buffered']
    #allocation4 [shape = 's32[1]{0}', space=sflag, size = 0x4, scoped, tag = 'scoped memory for tpu_custom_call.1']
    %10 = vsyncpa [#allocation4], 0
    // Predicated region
    $region2: #{tpu_custom_call.1} parent=1 // pred_check
      _
    $region3: #{tpu_custom_call.1} parent=1 // pred_check_branch
      %12 = sbr.rel (0) target = $region5
    $region4: #{tpu_custom_call.1} parent=1 // pred_region
      _
    $region5: #{tpu_custom_call.1} parent=1 // pred_fallthru
      _
    // Predicated region
    $region6: #{tpu_custom_call.1} parent=1 // pred_check
      _
    $region7: #{tpu_custom_call.1} parent=1 // pred_check_branch
      %14 = sbr.rel (0) target = $region9
    $region8: #{tpu_custom_call.1} parent=1 // pred_region
      _
    $region9: #{tpu_custom_call.1} parent=1 // pred_fallthru
      _
    // Predicated region
    $region10: #{tpu_custom_call.1} parent=1 // pred_check
      _
    $region11: #{tpu_custom_call.1} parent=1 // pred_check_branch
      %16 = sbr.rel (0) target = $region13
    $region12: #{tpu_custom_call.1} parent=1 // pred_region
      _
    $region13: #{tpu_custom_call.1} parent=1 // pred_fallthru
      _
    // Predicated region
    $region14: #{tpu_custom_call.1} parent=1 // pred_check
      _
    $region15: #{tpu_custom_call.1} parent=1 // pred_check_branch
      %18 = sbr.rel (0) target = $region17
    $region16: #{tpu_custom_call.1} parent=1 // pred_region
      _
    $region17: #{tpu_custom_call.1} parent=1 // pred_fallthru
      _
    // Predicated region
    $region18: #{tpu_custom_call.1} parent=1 // pred_check
      _
    $region19: #{tpu_custom_call.1} parent=1 // pred_check_branch
      %20 = sbr.rel (0) target = $region21
    $region20: #{tpu_custom_call.1} parent=1 // pred_region
      _
    $region21: #{tpu_custom_call.1} parent=1 // pred_fallthru
      _
    %p21 = scmp.eq.s32.totalorder 0, 0
    // Predicated region
    $region22: #{tpu_custom_call.1} parent=1 // pred_check
      %p22 = pneg %p21
    $region23: #{tpu_custom_call.1} parent=1 // pred_check_branch
      %24 = sbr.rel (%p22) target = $region25
    $region24: #{tpu_custom_call.1} parent=1 // pred_region
      %v25 = vld [vmem:[%s0] sm:$0xff]
      %v26 = vld [vmem:[%s0 + $0x8] sm:$0xff]
      %v27 = vld [vmem:[%s2] sm:$0x1]
      %vm28 = vcmask 261120
      %v29 = vsel %vm28, %v25, 0.0
      %30 = vadd.xlane.f32.xlu0 %v29
      %v31 = vpop.xlane.xlu0 %30
      %v32 = vsel %vm28, %v26, 0.0
      %33 = vadd.xlane.f32.xlu0 %v32
      %v34 = vpop.xlane.xlu0 %33
      %v35 = vmul.f32 %v31, 0.03125
      %v36 = vmul.f32 %v34, 0.03125
      %v37 = vsub.f32 %v25, %v35
      %v38 = vsub.f32 %v26, %v36
      %v39 = vmul.f32 %v37, %v37
      %v40 = vmul.f32 %v38, %v38
      %v41 = vsel %vm28, %v39, 0.0
      %42 = vadd.xlane.f32.xlu0 %v41
      %v43 = vpop.xlane.xlu0 %42
      %v44 = vsel %vm28, %v40, 0.0
      %45 = vadd.xlane.f32.xlu0 %v44
      %v46 = vpop.xlane.xlu0 %45
      %v47 = vmul.f32 %v43, 0.03125
      %v48 = vmul.f32 %v46, 0.03125
      %v49 = vadd.f32 %v47, 1e-05
      %v50 = vadd.f32 %v48, 1e-05
      %v51 = vrsqrt.pop %v49
      %v52 = vrsqrt.pop %v50
      %v53 = vmul.f32 %v37, %v51
      %v54 = vmul.f32 %v38, %v52
      %v56 = vlaneseq
      %v57 = vshrl.u32 %v56, 7
      %v58 = vsub.s32 0, %v57
      %v59 = vrot.slane %v27, %v58
      %v61 = vmul.f32 %v53, %v59
      %v62 = vmul.f32 %v54, %v59
      %v63 = vld [vmem:[%s3] sm:$0x1]
      %v65 = vlaneseq
      %v66 = vshrl.u32 %v65, 7
      %v67 = vsub.s32 0, %v66
      %v68 = vrot.slane %v63, %v67
      %v70 = vadd.f32 %v61, %v68
      %v71 = vadd.f32 %v62, %v68
      %72 = vst.msk [vmem:[#allocation2] sm:$0xff] %vm28, %v70
      %73 = vst.msk [vmem:[#allocation2 + $0x8] sm:$0xff] %vm28, %v71
    $region25: #{tpu_custom_call.1} parent=1 // pred_fallthru
      _
    %v74 = vld [vmem:[#allocation2] sm:$0xff]
    %v75 = vld [vmem:[#allocation2 + $0x8] sm:$0xff]
    %v76 = vld [vmem:[%s1] sm:$0xff]
    %v77 = vld [vmem:[%s1 + $0x8] sm:$0xff]
    %v78 = vld [vmem:[%s1 + $0x10] sm:$0xff]
    %v79 = vld [vmem:[%s1 + $0x18] sm:$0xff]
    %v80 = vld [vmem:[%s1 + $0x20] sm:$0xff]
    %v81 = vld [vmem:[%s1 + $0x28] sm:$0xff]
    %v82 = vld [vmem:[%s1 + $0x30] sm:$0xff]
    %v83 = vld [vmem:[%s1 + $0x38] sm:$0xff]
    %v84 = vld [vmem:[%s1 + $0x40] sm:$0xff]
    %v85 = vld [vmem:[%s1 + $0x48] sm:$0xff]
    %v86 = vld [vmem:[%s1 + $0x50] sm:$0xff]
    %v87 = vld [vmem:[%s1 + $0x58] sm:$0xff]
    %v88 = vld [vmem:[%s1 + $0x60] sm:$0xff]
    %v89 = vld [vmem:[%s1 + $0x68] sm:$0xff]
    %v90 = vld [vmem:[%s1 + $0x70] sm:$0xff]
    %v91 = vld [vmem:[%s1 + $0x78] sm:$0xff]
    %v92 = vld [vmem:[%s4] sm:$0x1]
    %v94 = vlaneseq
    %v95 = vshrl.u32 %v94, 7
    %v96 = vsub.s32 0, %v95
    %v97 = vrot.slane %v92, %v96
    %vm99 = vcmask 261120
    %v101 = vsel %vm99, %v74, 0
    %v104 = vsel %vm99, %v75, 0
    %v107 = vsel %vm99, %v76, 0
    %v110 = vsel %vm99, %v77, 0
    %v113 = vsel %vm99, %v78, 0
    %v116 = vsel %vm99, %v79, 0
    %v119 = vsel %vm99, %v80, 0
    %v122 = vsel %vm99, %v81, 0
    %v125 = vsel %vm99, %v82, 0
    %v128 = vsel %vm99, %v83, 0
    %v131 = vsel %vm99, %v84, 0
    %v134 = vsel %vm99, %v85, 0
    %v137 = vsel %vm99, %v86, 0
    %v140 = vsel %vm99, %v87, 0
    %v143 = vsel %vm99, %v88, 0
    %v146 = vsel %vm99, %v89, 0
    %v149 = vsel %vm99, %v90, 0
    %v152 = vsel %vm99, %v91, 0
    %154 = vmatprep.subr.mxu0 0.0
    %155 = vmatpush1.xpose.msra.mxu0 %v107
    %156 = vmatprep.subr.mxu0 0.0
    %157 = vmatpush1.xpose.msra.mxu0 %v110
    %158 = vmatprep.subr.mxu0 0.0
    %159 = vmatpush1.xpose.msra.mxu0 %v113
    %160 = vmatprep.subr.mxu0 0.0
    %161 = vmatpush1.xpose.msra.mxu0 %v116
    %162 = vmatprep.subr.mxu0 0.0
    %163 = vmatpush1.xpose.msra.mxu0 %v119
    %164 = vmatprep.subr.mxu0 0.0
    %165 = vmatpush1.xpose.msra.mxu0 %v122
    %166 = vmatprep.subr.mxu0 0.0
    %167 = vmatpush1.xpose.msra.mxu0 %v125
    %168 = vmatprep.subr.mxu0 0.0
    %169 = vmatpush1.xpose.msra.mxu0 %v128
    %170 = vmatprep.subr.mxu0 0.0
    %171 = vmatpush1.xpose.msra.mxu0 %v131
    %172 = vmatprep.subr.mxu0 0.0
    %173 = vmatpush1.xpose.msra.mxu0 %v134
    %174 = vmatprep.subr.mxu0 0.0
    %175 = vmatpush1.xpose.msra.mxu0 %v137
    %176 = vmatprep.subr.mxu0 0.0
    %177 = vmatpush1.xpose.msra.mxu0 %v140
    %178 = vmatprep.subr.mxu0 0.0
    %179 = vmatpush1.xpose.msra.mxu0 %v143
    %180 = vmatprep.subr.mxu0 0.0
    %181 = vmatpush1.xpose.msra.mxu0 %v146
    %182 = vmatprep.subr.mxu0 0.0
    %183 = vmatpush1.xpose.msra.mxu0 %v149
    %184 = vmatprep.subr.mxu0 0.0
    %185 = vmatpush1.xpose.msra.mxu0 %v152
    %186 = vmatprep.subr.mxu0 0.0
    %187 = vmatpush1.xpose.msra.mxu0 0.0
    %188 = vmatprep.subr.mxu0 0.0
    %189 = vmatpush1.xpose.msra.mxu0 0.0
    %190 = vmatprep.subr.mxu0 0.0
    %191 = vmatpush1.xpose.msra.mxu0 0.0
    %192 = vmatprep.subr.mxu0 0.0
    %193 = vmatpush1.xpose.msra.mxu0 0.0
    %194 = vmatprep.subr.mxu0 0.0
    %195 = vmatpush1.xpose.msra.mxu0 0.0
    %196 = vmatprep.subr.mxu0 0.0
    %197 = vmatpush1.xpose.msra.mxu0 0.0
    %198 = vmatprep.subr.mxu0 0.0
    %199 = vmatpush1.xpose.msra.mxu0 0.0
    %200 = vmatprep.subr.mxu0 0.0
    %201 = vmatpush1.xpose.msra.mxu0 0.0
    %202 = vmatprep.subr.mxu0 0.0
    %203 = vmatpush1.xpose.msra.mxu0 0.0
    %204 = vmatprep.subr.mxu0 0.0
    %205 = vmatpush1.xpose.msra.mxu0 0.0
    %206 = vmatprep.subr.mxu0 0.0
    %207 = vmatpush1.xpose.msra.mxu0 0.0
    %208 = vmatprep.subr.mxu0 0.0
    %209 = vmatpush1.xpose.msra.mxu0 0.0
    %210 = vmatprep.subr.mxu0 0.0
    %211 = vmatpush1.xpose.msra.mxu0 0.0
    %212 = vmatprep.subr.mxu0 0.0
    %213 = vmatpush1.xpose.msra.mxu0 0.0
    %214 = vmatprep.subr.mxu0 0.0
    %215 = vmatpush1.xpose.msra.mxu0 0.0
    %216 = vmatprep.subr.mxu0 0.0
    %217 = vmatpush1.xpose.msra.mxu0 0.0
    %218 = vmatprep.mubr.f32.mxu0 0.0
    %219 = vmatmul.mubr.f32.gmra.mrb[0].mxu0 %v101
    %v220 = vpop.f32.mrb[0].mxu0
    %v221 = vadd.f32 %v97, %v220
    %v222 = vpop.f32.mrb[0].mxu0
    %223 = vmatprep.mubr.f32.mxu0 0.0
    %224 = vmatmul.mubr.f32.gmra.mrb[0].mxu0 %v104
    %v225 = vpop.f32.mrb[0].mxu0
    %v226 = vadd.f32 %v97, %v225
    %v227 = vpop.f32.mrb[0].mxu0
    %228 = vdwg.mxu0
    %229 = vst [vmem:[#allocation3] sm:$0xff] %v221
    %230 = vst [vmem:[#allocation3 + $0x8] sm:$0xff] %v226
    // Predicated region
    $region26: #{tpu_custom_call.1} parent=1 // pred_check
      _
    $region27: #{tpu_custom_call.1} parent=1 // pred_check_branch
      %232 = sbr.rel (0) target = $region29
    $region28: #{tpu_custom_call.1} parent=1 // pred_region
      %s234 = ssub.s32 256, 256
      %235 = vsyncadd [#allocation4], %s234
      %s236 = sshll.u32 [#allocation3], 4
      %s237 = int_to_ptr.vmem [resolvable:$true] %s236
      %242 = dma.vmem_to_hbm [thread:$0]  %s237, 256, %s5, [#allocation4], 128, 128, 8
    $region29: #{tpu_custom_call.1} parent=1 // pred_fallthru
      _
    // Predicated region
    $region30: #{tpu_custom_call.1} parent=1 // pred_check
      _
    $region31: #{tpu_custom_call.1} parent=1 // pred_check_branch
      %244 = sbr.rel (0) target = $region33
    $region32: #{tpu_custom_call.1} parent=1 // pred_region
      %245 = dma.done [#allocation4], 256
    $region33: #{tpu_custom_call.1} parent=1 // pred_fallthru
      _
    %246 = vsyncpa [#allocation4], 1

</llo_original>
